<compile_context>
chip_gen: v6e
topology: v6e:2x2x1
jax: 0.10.0
libtpu: 0.0.40
codegen_flags: <defaults>
</compile_context>

<pallas_src>
import functools

import jax
import jax.numpy as jnp
import numpy as np
from jax.experimental import pallas as pl
from jax.experimental.pallas import tpu as pltpu

LN_EPS = 1e-5  # PyTorch nn.LayerNorm default

# Token tables up to this many bytes are kept as a single VMEM-resident tile.
_SINGLE_TILE_TABLE_BYTES = 8 * 1024 * 1024


def _round_up(x, m):
    return (x + m - 1) // m * m


def _embedding_kernel(ids_ref,      # VMEM [TS, 1]  int32 token ids for this block
                      tok_ref,      # VMEM [TV, D]  f32 vocab tile
                      pos_ref,      # VMEM [TS, D]  f32 positional rows for this block
                      gamma_ref,    # VMEM [1, D]   f32
                      beta_ref,     # VMEM [1, D]   f32
                      out_ref):     # VMEM [TS, D]  f32 (resident across vocab axis)
    v = pl.program_id(2)
    n_v = pl.num_programs(2)
    tile_s = out_ref.shape[0]
    tile_v = tok_ref.shape[0]

    # ---- token gather: exact one-hot MXU matmul over the current vocab tile ----
    ids = ids_ref[...]                                                   # [TS, 1]
    vocab_ids = (jax.lax.broadcasted_iota(jnp.int32, (tile_s, tile_v), 1)
                 + v * tile_v)
    one_hot = (ids == vocab_ids).astype(jnp.float32)                     # [TS, TV]
    partial = jnp.dot(one_hot, tok_ref[...],
                      preferred_element_type=jnp.float32,
                      precision=jax.lax.Precision.HIGHEST)               # [TS, D]

    @pl.when(v == 0)
    def _():
        out_ref[...] = partial

    @pl.when(v > 0)
    def _():
        out_ref[...] += partial

    # ---- finalize: positional add (plain vector add) + fused LayerNorm ----
    @pl.when(v == n_v - 1)
    def _():
        x = out_ref[...] + pos_ref[...]
        mean = jnp.mean(x, axis=-1, keepdims=True)
        var = jnp.mean(jnp.square(x - mean), axis=-1, keepdims=True)     # biased (PyTorch)
        y = (x - mean) * jax.lax.rsqrt(var + LN_EPS)
        out_ref[...] = (y * gamma_ref[...] + beta_ref[...]).astype(out_ref.dtype)


@functools.partial(jax.jit, static_argnames=("tile_s", "tile_v"))
def embedding_forward(token_ids, tok_table, pos_table, gamma, beta,
                      tile_s=256, tile_v=None):
    """token_ids: [B, S] int32.  Returns [B, S, D] float32."""
    B, S = token_ids.shape
    V, D = tok_table.shape
    maxlen = pos_table.shape[0]
    assert S <= maxlen

    # --- seq tiling (axis 1 of the grid) ---
    tile_s = min(tile_s, _round_up(S, 8))
    s_pad = _round_up(S, tile_s)
    n_s_blocks = s_pad // tile_s

    # --- vocab tiling (reduction axis, innermost) ---
    v_rounded = _round_up(V, 8)
    if tile_v is None:
        table_bytes = v_rounded * D * 4
        tile_v = v_rounded if table_bytes <= _SINGLE_TILE_TABLE_BYTES else 512
    tile_v = min(tile_v, v_rounded)
    v_pad = _round_up(V, tile_v)
    n_v_blocks = v_pad // tile_v

    # --- operand prep / padding ---
    ids = jnp.pad(token_ids.astype(jnp.int32), ((0, 0), (0, s_pad - S)))
    ids_flat = ids.reshape(B * s_pad, 1)

    tok_p = jnp.pad(tok_table.astype(jnp.float32), ((0, v_pad - V), (0, 0)))
    pos_p = jnp.pad(pos_table[:S].astype(jnp.float32), ((0, s_pad - S), (0, 0)))
    gamma2 = gamma.reshape(1, D).astype(jnp.float32)
    beta2 = beta.reshape(1, D).astype(jnp.float32)

    grid = (B, n_s_blocks, n_v_blocks)

    out = pl.pallas_call(
        _embedding_kernel,
        out_shape=jax.ShapeDtypeStruct((B * s_pad, D), jnp.float32),
        grid_spec=pltpu.PrefetchScalarGridSpec(
            num_scalar_prefetch=0,
            grid=grid,
            in_specs=[
                pl.BlockSpec((tile_s, 1),
                             lambda b, s, v: (b * n_s_blocks + s, 0)),   # token ids
                pl.BlockSpec((tile_v, D), lambda b, s, v: (v, 0)),       # vocab tile
                pl.BlockSpec((tile_s, D), lambda b, s, v: (s, 0)),       # pos rows
                pl.BlockSpec((1, D), lambda b, s, v: (0, 0)),            # gamma
                pl.BlockSpec((1, D), lambda b, s, v: (0, 0)),            # beta
            ],
            out_specs=pl.BlockSpec((tile_s, D),
                                   lambda b, s, v: (b * n_s_blocks + s, 0)),
        ),
        compiler_params=pltpu.CompilerParams(
            dimension_semantics=("parallel", "parallel", "arbitrary")),
    )(ids_flat, tok_p, pos_p, gamma2, beta2)

    return out.reshape(B, s_pad, D)[:, :S]


def embedding_ref(token_ids, tok_table, pos_table, gamma, beta):
    """Pure-JAX reference (mirrors the PyTorch module)."""
    S = token_ids.shape[1]
    emb = jnp.take(tok_table, token_ids, axis=0) + pos_table[None, :S, :]
    mean = jnp.mean(emb, axis=-1, keepdims=True)
    var = jnp.mean(jnp.square(emb - mean), axis=-1, keepdims=True)
    y = (emb - mean) * jax.lax.rsqrt(var + LN_EPS)
    return y * gamma + beta


if __name__ == "__main__":
    # Small hyper-parameters consistent with the module's forward pass.
    vocab_size, d_model, maxlen = 64, 32, 16
    batch, seq = 2, 8

    key = jax.random.PRNGKey(0)
    k_tok, k_pos, k_ids = jax.random.split(key, 3)

    # nn.Embedding ~ N(0,1); LayerNorm: gamma=1, beta=0.
    tok_table = jax.random.normal(k_tok, (vocab_size, d_model), dtype=jnp.float32)
    pos_table = jax.random.normal(k_pos, (maxlen, d_model), dtype=jnp.float32)
    gamma = jnp.ones((d_model,), dtype=jnp.float32)
    beta = jnp.zeros((d_model,), dtype=jnp.float32)

    token_ids = jax.random.randint(k_ids, (batch, seq), 0, vocab_size, dtype=jnp.int32)

    out = embedding_forward(token_ids, tok_table, pos_table, gamma, beta)
    out = jax.block_until_ready(out)

    ref = embedding_ref(token_ids, tok_table, pos_table, gamma, beta)
    assert out.shape == (batch, seq, d_model)
    np.testing.assert_allclose(np.asarray(out), np.asarray(ref), rtol=5e-5, atol=5e-5)

    print("KERNEL_OK")
</pallas_src>

<mosaic_0001>
module attributes {stable_mosaic.version = 11 : i64} {
  func.func @_embedding_kernel(%arg0: i32, %arg1: i32, %arg2: i32, %arg3: memref<8x1xi32, #tpu.memory_space<vmem>>, %arg4: memref<64x32xf32, #tpu.memory_space<vmem>>, %arg5: memref<8x32xf32, #tpu.memory_space<vmem>>, %arg6: memref<1x32xf32, #tpu.memory_space<vmem>>, %arg7: memref<1x32xf32, #tpu.memory_space<vmem>>, %arg8: memref<8x32xf32, #tpu.memory_space<vmem>>) attributes {dimension_semantics = [#tpu.dimension_semantics<parallel>, #tpu.dimension_semantics<parallel>, #tpu.dimension_semantics<arbitrary>], iteration_bounds = array<i64: 2, 1, 1>, scalar_prefetch = 0 : i64, scratch_operands = 0 : i64, tpu.core_type = #tpu.core_type<tc>, window_params = [{transform_indices = @transform_0, window_bounds = array<i64: 8, 1>}, {transform_indices = @transform_1, window_bounds = array<i64: 64, 32>}, {transform_indices = @transform_2, window_bounds = array<i64: 8, 32>}, {pipeline_mode = #tpu.pipeline_mode<synchronous>, transform_indices = @transform_3, window_bounds = array<i64: 1, 32>}, {pipeline_mode = #tpu.pipeline_mode<synchronous>, transform_indices = @transform_4, window_bounds = array<i64: 1, 32>}, {transform_indices = @transform_5, window_bounds = array<i64: 8, 32>}]} {
    %c0 = arith.constant 0 : index
    %c0_0 = arith.constant 0 : index
    %0 = vector.load %arg3[%c0, %c0_0] : memref<8x1xi32, #tpu.memory_space<vmem>>, vector<8x1xi32>
    %1 = tpu.iota {dimensions = array<i32: 1>} : vector<8x64xi32>
    %c64_i32 = arith.constant 64 : i32
    %2 = arith.muli %arg2, %c64_i32 : i32
    %3 = vector.broadcast %2 : i32 to vector<8x64xi32>
    %4 = arith.addi %1, %3 : vector<8x64xi32>
    %5 = vector.broadcast %0 : vector<8x1xi32> to vector<8x64xi32>
    %6 = arith.cmpi eq, %5, %4 : vector<8x64xi32>
    %7 = arith.extui %6 : vector<8x64xi1> to vector<8x64xi32>
    %8 = arith.sitofp %7 : vector<8x64xi32> to vector<8x64xf32>
    %c0_1 = arith.constant 0 : index
    %c0_2 = arith.constant 0 : index
    %9 = vector.load %arg4[%c0_1, %c0_2] : memref<64x32xf32, #tpu.memory_space<vmem>>, vector<64x32xf32>
    %cst = arith.constant dense<0.000000e+00> : vector<8x32xf32>
    %10 = tpu.matmul %8, %9, %cst {dimension_numbers = #tpu.dot_dimension_numbers<[1], [0], [0], [1], [0, 0, 1, 1], [], []>, precision = #tpu.contract_precision<fp32>} : vector<8x64xf32>, vector<64x32xf32>, vector<8x32xf32> -> vector<8x32xf32>
    %c0_i32 = arith.constant 0 : i32
    %11 = arith.cmpi eq, %arg2, %c0_i32 : i32
    %12 = arith.extui %11 : i1 to i32
    %c0_i32_3 = arith.constant 0 : i32
    %13 = arith.cmpi ne, %12, %c0_i32_3 : i32
    scf.if %13 {
      %c0_8 = arith.constant 0 : index
      %c0_9 = arith.constant 0 : index
      %20 = vector.load %arg8[%c0_8, %c0_9] : memref<8x32xf32, #tpu.memory_space<vmem>>, vector<8x32xf32>
      tpu.vector_store %arg8[%c0_8, %c0_9], %10 {strides = array<i32>} : memref<8x32xf32, #tpu.memory_space<vmem>>, vector<8x32xf32>,
    } else {
    }
    %c0_i32_4 = arith.constant 0 : i32
    %14 = arith.cmpi sgt, %arg2, %c0_i32_4 : i32
    %15 = arith.extui %14 : i1 to i32
    %c0_i32_5 = arith.constant 0 : i32
    %16 = arith.cmpi ne, %15, %c0_i32_5 : i32
    scf.if %16 {
      %c0_8 = arith.constant 0 : index
      %c0_9 = arith.constant 0 : index
      %20 = vector.load %arg8[%c0_8, %c0_9] : memref<8x32xf32, #tpu.memory_space<vmem>>, vector<8x32xf32>
      %21 = arith.addf %20, %10 : vector<8x32xf32>
      %c0_10 = arith.constant 0 : index
      %c0_11 = arith.constant 0 : index
      %22 = vector.load %arg8[%c0_10, %c0_11] : memref<8x32xf32, #tpu.memory_space<vmem>>, vector<8x32xf32>
      tpu.vector_store %arg8[%c0_10, %c0_11], %21 {strides = array<i32>} : memref<8x32xf32, #tpu.memory_space<vmem>>, vector<8x32xf32>,
    } else {
    }
    %c0_i32_6 = arith.constant 0 : i32
    %17 = arith.cmpi eq, %arg2, %c0_i32_6 : i32
    %18 = arith.extui %17 : i1 to i32
    %c0_i32_7 = arith.constant 0 : i32
    %19 = arith.cmpi ne, %18, %c0_i32_7 : i32
    scf.if %19 {
      %c0_8 = arith.constant 0 : index
      %c0_9 = arith.constant 0 : index
      %20 = vector.load %arg8[%c0_8, %c0_9] : memref<8x32xf32, #tpu.memory_space<vmem>>, vector<8x32xf32>
      %c0_10 = arith.constant 0 : index
      %c0_11 = arith.constant 0 : index
      %21 = vector.load %arg5[%c0_10, %c0_11] : memref<8x32xf32, #tpu.memory_space<vmem>>, vector<8x32xf32>
      %22 = arith.addf %20, %21 : vector<8x32xf32>
      %cst_12 = arith.constant dense<0.000000e+00> : vector<8xf32>
      %23 = vector.multi_reduction <add>, %22, %cst_12 [1] : vector<8x32xf32> to vector<8xf32>
      %24 = vector.shape_cast %23 : vector<8xf32> to vector<8x1xf32>
      %cst_13 = arith.constant 3.200000e+01 : f32
      %25 = vector.broadcast %cst_13 : f32 to vector<8x1xf32>
      %26 = arith.divf %24, %25 : vector<8x1xf32>
      %27 = vector.broadcast %26 : vector<8x1xf32> to vector<8x32xf32>
      %28 = arith.subf %22, %27 : vector<8x32xf32>
      %29 = arith.mulf %28, %28 : vector<8x32xf32>
      %cst_14 = arith.constant dense<0.000000e+00> : vector<8xf32>
      %30 = vector.multi_reduction <add>, %29, %cst_14 [1] : vector<8x32xf32> to vector<8xf32>
      %31 = vector.shape_cast %30 : vector<8xf32> to vector<8x1xf32>
      %cst_15 = arith.constant 3.200000e+01 : f32
      %32 = vector.broadcast %cst_15 : f32 to vector<8x1xf32>
      %33 = arith.divf %31, %32 : vector<8x1xf32>
      %34 = vector.broadcast %26 : vector<8x1xf32> to vector<8x32xf32>
      %35 = arith.subf %22, %34 : vector<8x32xf32>
      %cst_16 = arith.constant 9.99999974E-6 : f32
      %36 = vector.broadcast %cst_16 : f32 to vector<8x1xf32>
      %37 = arith.addf %33, %36 : vector<8x1xf32>
      %38 = math.rsqrt %37 : vector<8x1xf32>
      %39 = vector.broadcast %38 : vector<8x1xf32> to vector<8x32xf32>
      %40 = arith.mulf %35, %39 : vector<8x32xf32>
      %c0_17 = arith.constant 0 : index
      %c0_18 = arith.constant 0 : index
      %41 = vector.load %arg6[%c0_17, %c0_18] : memref<1x32xf32, #tpu.memory_space<vmem>>, vector<1x32xf32>
      %42 = vector.broadcast %41 : vector<1x32xf32> to vector<8x32xf32>
      %43 = arith.mulf %40, %42 : vector<8x32xf32>
      %c0_19 = arith.constant 0 : index
      %c0_20 = arith.constant 0 : index
      %44 = vector.load %arg7[%c0_19, %c0_20] : memref<1x32xf32, #tpu.memory_space<vmem>>, vector<1x32xf32>
      %45 = vector.broadcast %44 : vector<1x32xf32> to vector<8x32xf32>
      %46 = arith.addf %43, %45 : vector<8x32xf32>
      %c0_21 = arith.constant 0 : index
      %c0_22 = arith.constant 0 : index
      %47 = vector.load %arg8[%c0_21, %c0_22] : memref<8x32xf32, #tpu.memory_space<vmem>>, vector<8x32xf32>
      tpu.vector_store %arg8[%c0_21, %c0_22], %46 {strides = array<i32>} : memref<8x32xf32, #tpu.memory_space<vmem>>, vector<8x32xf32>,
    } else {
    }
    return
  }
  func.func @transform_0(%arg0: i32, %arg1: i32, %arg2: i32) -> (i32, i32) {
    %c1_i32 = arith.constant 1 : i32
    %0 = arith.muli %arg0, %c1_i32 : i32
    %1 = arith.addi %0, %arg1 : i32
    %c0_i32 = arith.constant 0 : i32
    %c0_i32_0 = arith.constant 0 : i32
    return %1, %c0_i32 : i32, i32
  }
  func.func @transform_1(%arg0: i32, %arg1: i32, %arg2: i32) -> (i32, i32) {
    %c0_i32 = arith.constant 0 : i32
    %c0_i32_0 = arith.constant 0 : i32
    return %arg2, %c0_i32 : i32, i32
  }
  func.func @transform_2(%arg0: i32, %arg1: i32, %arg2: i32) -> (i32, i32) {
    %c0_i32 = arith.constant 0 : i32
    %c0_i32_0 = arith.constant 0 : i32
    return %arg1, %c0_i32 : i32, i32
  }
  func.func @transform_3(%arg0: i32, %arg1: i32, %arg2: i32) -> (i32, i32) {
    %c0_i32 = arith.constant 0 : i32
    %c0_i32_0 = arith.constant 0 : i32
    %c0_i32_1 = arith.constant 0 : i32
    return %c0_i32, %c0_i32_0 : i32, i32
  }
  func.func @transform_4(%arg0: i32, %arg1: i32, %arg2: i32) -> (i32, i32) {
    %c0_i32 = arith.constant 0 : i32
    %c0_i32_0 = arith.constant 0 : i32
    %c0_i32_1 = arith.constant 0 : i32
    return %c0_i32, %c0_i32_0 : i32, i32
  }
  func.func @transform_5(%arg0: i32, %arg1: i32, %arg2: i32) -> (i32, i32) {
    %c1_i32 = arith.constant 1 : i32
    %0 = arith.muli %arg0, %c1_i32 : i32
    %1 = arith.addi %0, %arg1 : i32
    %c0_i32 = arith.constant 0 : i32
    %c0_i32_0 = arith.constant 0 : i32
    return %1, %c0_i32 : i32, i32
  }
}

</mosaic_0001>

<llo_original>
// kernel: embedding_forward.1
$region0: #{embedding_forward.1}
  #allocation0 [shape = 'u32[]', space=smem, size = 0x4, offset = 0x4, fixed_abs, tag = 'smem constant byte address 0x4 - core index']
  #allocation1 [shape = 'u32[144,128]{1,0:T(1,128)}', space=vmem, size = 0x12000, scoped, tag = 'internal scratch']
  %s0 = inlined_call_operand.vmem [shape: s32[16,1], index: 0, kind: input, shape index: {}]
  %s1 = inlined_call_operand.vmem [shape: f32[64,32], index: 1, kind: input, shape index: {}]
  %s2 = inlined_call_operand.vmem [shape: f32[8,32], index: 2, kind: input, shape index: {}]
  %s3 = inlined_call_operand.vmem [shape: f32[1,32], index: 3, kind: input, shape index: {}]
  %s4 = inlined_call_operand.vmem [shape: f32[1,32], index: 4, kind: input, shape index: {}]
  %s5 = inlined_call_operand.hbm [shape: f32[16,32], index: 5, kind: output, shape index: {}]
  %s6 = sld [smem:[#allocation0]]
  $region65: #{embedding_forward.1} parent=0
    _
  %s8 = ssub.s32 1, %s6
  %s9 = scalar_select 0, %s8, %s6
  $region1: #{embedding_forward.1} parent=0
    #allocation2 [shape = 'u8[8192]{0}', space=vmem, size = 0x2000, scoped, tag = 'output window, operand 0']
    #allocation3 [shape = 's32[2]{0}', space=sflag, size = 0x8, scoped, tag = 'scoped memory for embedding_forward.1']
    %10 = vsyncpa [#allocation3], 0
    %s11 = scalar_lea.sflag [#allocation3], 1
    %12 = vsyncpa %s11, 0
    loop: start=0, step=1, limit=4
    $region2: #{embedding_forward.1} parent=1 // loop_pre_header
      _
    $region3: #{embedding_forward.1} parent=1 // loop_header
      %s14 = sphi 0, %s18
      %p15 = scmp.ge.s32.totalorder %s14, 4
      %s21 = sphi 0, %s40
      %s22 = sphi 0, %s36
      %s23 = sphi 0, %s32
      %s24 = sphi 0, %s21
      %s25 = sphi 0, %s22
      %s26 = sphi 0, %s23
      %s27 = sphi 0, %s24
      %s28 = sphi 0, %s25
      %s29 = sphi 0, %s26
      %s45 = sphi 0, %s47
      %s48 = sphi 0, %s45
      %s49 = sphi 0, %s48
      %s65 = sphi 0, %s49
      %s71 = sphi 0, %s73
      %s74 = sphi 0, %s71
      %s75 = sphi 0, %s74
      %s91 = sphi 0, %s75
      %s97 = sphi 0, %s99
      %s100 = sphi 0, %s97
      %s101 = sphi 0, %s100
      %s117 = sphi 0, %s101
      %s121 = sphi 0, %s121
      %s123 = sphi 0, %s121
      %s124 = sphi 0, %s123
      %s138 = sphi 0, %s124
      %s142 = sphi 0, %s142
      %s144 = sphi 0, %s142
      %s145 = sphi 0, %s144
      %s159 = sphi 0, %s145
      %s167 = sphi 0, %s169
      %s170 = sphi 0, %s167
      %s171 = sphi 0, %s170
      %s187 = sphi 0, %s171
    $region4: #{embedding_forward.1} parent=1 // loop_header_branch
      %17 = sbr.rel (%p15) target = $region8
    $region5: #{embedding_forward.1} parent=1 // loop_body
      %s19 = ssub.s32 %s14, 1
      %s20 = ssub.s32 %s14, 2
      %s30 = sadd.s32 1, %s23
      %p31 = scmp.ge.s32.totalorder %s30, 1
      %s32 = scalar_select %p31, 0, %s30
      %s33 = sadd.s32 1, %s22
      %s34 = scalar_select %p31, %s33, %s22
      %p35 = scmp.ge.s32.totalorder %s34, 1
      %s36 = scalar_select %p35, 0, %s34
      %s37 = sadd.s32 1, %s21
      %s38 = scalar_select %p35, %s37, %s21
      %p39 = scmp.ge.s32.totalorder %s38, 2
      %s40 = scalar_select %p39, 0, %s38
      %s41 = sadd.s32 %s21, %s22
      %s42 = sadd.s32 %s40, %s36
      %s43 = ssub.s32 %s41, %s42
      %p44 = scmp.eq.s32.totalorder %s43, 0
      %s46 = sadd.s32 %s45, 1
      %s47 = scalar_select %p44, %s45, %s46
      %p50 = pneg %p44
      %p51 = scmp.eq.s32.totalorder %s14, 1
      %p52 = por %p50, %p51
      %p53 = scmp.ne.s32.totalorder %s45, %s48
      %p54 = scmp.eq.s32.totalorder %s14, 0
      %p55 = por %p53, %p54
      %p56 = scmp.ne.s32.totalorder %s45, %s48
      %p57 = scmp.eq.s32.totalorder %s19, 1
      %p58 = por %p56, %p57
      %p59 = scmp.ne.s32.totalorder %s48, %s49
      %p60 = scmp.eq.s32.totalorder %s19, 0
      %p61 = por %p59, %p60
      %p62 = scmp.ne.s32.totalorder %s48, %s49
      %p63 = scmp.eq.s32.totalorder %s20, 1
      %p64 = por %p62, %p63
      %p66 = scmp.ne.s32.totalorder %s49, %s65
      %p67 = scmp.eq.s32.totalorder %s20, 0
      %p68 = por %p66, %p67
      %s69 = ssub.s32 %s23, %s32
      %p70 = scmp.eq.s32.totalorder %s69, 0
      %s72 = sadd.s32 %s71, 1
      %s73 = scalar_select %p70, %s71, %s72
      %p76 = pneg %p70
      %p77 = scmp.eq.s32.totalorder %s14, 1
      %p78 = por %p76, %p77
      %p79 = scmp.ne.s32.totalorder %s71, %s74
      %p80 = scmp.eq.s32.totalorder %s14, 0
      %p81 = por %p79, %p80
      %p82 = scmp.ne.s32.totalorder %s71, %s74
      %p83 = scmp.eq.s32.totalorder %s19, 1
      %p84 = por %p82, %p83
      %p85 = scmp.ne.s32.totalorder %s74, %s75
      %p86 = scmp.eq.s32.totalorder %s19, 0
      %p87 = por %p85, %p86
      %p88 = scmp.ne.s32.totalorder %s74, %s75
      %p89 = scmp.eq.s32.totalorder %s20, 1
      %p90 = por %p88, %p89
      %p92 = scmp.ne.s32.totalorder %s75, %s91
      %p93 = scmp.eq.s32.totalorder %s20, 0
      %p94 = por %p92, %p93
      %s95 = ssub.s32 %s22, %s36
      %p96 = scmp.eq.s32.totalorder %s95, 0
      %s98 = sadd.s32 %s97, 1
      %s99 = scalar_select %p96, %s97, %s98
      %p102 = pneg %p96
      %p103 = scmp.eq.s32.totalorder %s14, 1
      %p104 = por %p102, %p103
      %p105 = scmp.ne.s32.totalorder %s97, %s100
      %p106 = scmp.eq.s32.totalorder %s14, 0
      %p107 = por %p105, %p106
      %p108 = scmp.ne.s32.totalorder %s97, %s100
      %p109 = scmp.eq.s32.totalorder %s19, 1
      %p110 = por %p108, %p109
      %p111 = scmp.ne.s32.totalorder %s100, %s101
      %p112 = scmp.eq.s32.totalorder %s19, 0
      %p113 = por %p111, %p112
      %p114 = scmp.ne.s32.totalorder %s100, %s101
      %p115 = scmp.eq.s32.totalorder %s20, 1
      %p116 = por %p114, %p115
      %p118 = scmp.ne.s32.totalorder %s101, %s117
      %p119 = scmp.eq.s32.totalorder %s20, 0
      %p120 = por %p118, %p119
      %s122 = sadd.s32 %s121, 1
      %p125 = scmp.eq.s32.totalorder %s14, 1
      %p126 = scmp.ne.s32.totalorder %s121, %s123
      %p127 = scmp.eq.s32.totalorder %s14, 0
      %p128 = por %p126, %p127
      %p129 = scmp.ne.s32.totalorder %s121, %s123
      %p130 = scmp.eq.s32.totalorder %s19, 1
      %p131 = por %p129, %p130
      %p132 = scmp.ne.s32.totalorder %s123, %s124
      %p133 = scmp.eq.s32.totalorder %s19, 0
      %p134 = por %p132, %p133
      %p135 = scmp.ne.s32.totalorder %s123, %s124
      %p136 = scmp.eq.s32.totalorder %s20, 1
      %p137 = por %p135, %p136
      %p139 = scmp.ne.s32.totalorder %s124, %s138
      %p140 = scmp.eq.s32.totalorder %s20, 0
      %p141 = por %p139, %p140
      %s143 = sadd.s32 %s142, 1
      %p146 = scmp.eq.s32.totalorder %s14, 1
      %p147 = scmp.ne.s32.totalorder %s142, %s144
      %p148 = scmp.eq.s32.totalorder %s14, 0
      %p149 = por %p147, %p148
      %p150 = scmp.ne.s32.totalorder %s142, %s144
      %p151 = scmp.eq.s32.totalorder %s19, 1
      %p152 = por %p150, %p151
      %p153 = scmp.ne.s32.totalorder %s144, %s145
      %p154 = scmp.eq.s32.totalorder %s19, 0
      %p155 = por %p153, %p154
      %p156 = scmp.ne.s32.totalorder %s144, %s145
      %p157 = scmp.eq.s32.totalorder %s20, 1
      %p158 = por %p156, %p157
      %p160 = scmp.ne.s32.totalorder %s145, %s159
      %p161 = scmp.eq.s32.totalorder %s20, 0
      %p162 = por %p160, %p161
      %s163 = sadd.s32 %s21, %s22
      %s164 = sadd.s32 %s40, %s36
      %s165 = ssub.s32 %s163, %s164
      %p166 = scmp.eq.s32.totalorder %s165, 0
      %s168 = sadd.s32 %s167, 1
      %s169 = scalar_select %p166, %s167, %s168
      %p172 = pneg %p166
      %p173 = scmp.eq.s32.totalorder %s14, 1
      %p174 = por %p172, %p173
      %p175 = scmp.ne.s32.totalorder %s167, %s170
      %p176 = scmp.eq.s32.totalorder %s14, 0
      %p177 = por %p175, %p176
      %p178 = scmp.ne.s32.totalorder %s167, %s170
      %p179 = scmp.eq.s32.totalorder %s19, 1
      %p180 = por %p178, %p179
      %p181 = scmp.ne.s32.totalorder %s170, %s171
      %p182 = scmp.eq.s32.totalorder %s19, 0
      %p183 = por %p181, %p182
      %p184 = scmp.ne.s32.totalorder %s170, %s171
      %p185 = scmp.eq.s32.totalorder %s20, 1
      %p186 = por %p184, %p185
      %p188 = scmp.ne.s32.totalorder %s171, %s187
      %p189 = scmp.eq.s32.totalorder %s20, 0
      %p190 = por %p188, %p189
      %p191 = scmp.le.s32.totalorder 1, %s14
      %p192 = scmp.lt.s32.totalorder %s14, 3
      %p193 = pnand %p191, %p192
      %p194 = pneg %p193
      // Predicated region
      $region9: #{embedding_forward.1} parent=5 // pred_check
        _
      $region10: #{embedding_forward.1} parent=5 // pred_check_branch
        %196 = sbr.rel (%p193) target = $region12
      $region11: #{embedding_forward.1} parent=5 // pred_region
        %s197 = ssub.s32 %s14, 1
        // Predicated region
        $region13: #{embedding_forward.1} parent=11 // pred_check
          %p198 = pneg %p87
        $region14: #{embedding_forward.1} parent=11 // pred_check_branch
          %200 = sbr.rel (%p198) target = $region16
        $region15: #{embedding_forward.1} parent=11 // pred_region
          %s201 = smul.u32 8, %s26
          %p202 = scmp.lt.s32.totalorder %s201, 7
          %s203 = scalar_select %p202, %s201, 7
          %s204 = smul.addr %s203, 8
          %s205 = scalar_lea.vmem %s1, %s204
          %s206 = smul.u32 8, %s26
        $region16: #{embedding_forward.1} parent=11 // pred_fallthru
          _
        // Predicated region
        $region17: #{embedding_forward.1} parent=11 // pred_check
          %p207 = pneg %p113
        $region18: #{embedding_forward.1} parent=11 // pred_check_branch
          %209 = sbr.rel (%p207) target = $region20
        $region19: #{embedding_forward.1} parent=11 // pred_region
          %p210 = scmp.lt.s32.totalorder %s25, 0
          %s211 = scalar_select %p210, %s25, 0
          %s212 = smul.addr %s211, 8
          %s213 = scalar_lea.vmem %s2, %s212
        $region20: #{embedding_forward.1} parent=11 // pred_fallthru
          _
        // Predicated region
        $region21: #{embedding_forward.1} parent=11 // pred_check
          %p214 = pneg %p134
        $region22: #{embedding_forward.1} parent=11 // pred_check_branch
          %216 = sbr.rel (%p214) target = $region24
        $region23: #{embedding_forward.1} parent=11 // pred_region
          _
        $region24: #{embedding_forward.1} parent=11 // pred_fallthru
          _
        // Predicated region
        $region25: #{embedding_forward.1} parent=11 // pred_check
          %p217 = pneg %p155
        $region26: #{embedding_forward.1} parent=11 // pred_check_branch
          %219 = sbr.rel (%p217) target = $region28
        $region27: #{embedding_forward.1} parent=11 // pred_region
          _
        $region28: #{embedding_forward.1} parent=11 // pred_fallthru
          _
      $region12: #{embedding_forward.1} parent=5 // pred_fallthru
        _
      %p220 = scmp.lt.s32.totalorder %s14, 2
      // Predicated region
      $region29: #{embedding_forward.1} parent=5 // pred_check
        %p221 = pneg %p220
      $region30: #{embedding_forward.1} parent=5 // pred_check_branch
        %223 = sbr.rel (%p221) target = $region32
      $region31: #{embedding_forward.1} parent=5 // pred_region
        // Predicated region
        $region33: #{embedding_forward.1} parent=31 // pred_check
          %p224 = pneg %p55
        $region34: #{embedding_forward.1} parent=31 // pred_check_branch
          %226 = sbr.rel (%p224) target = $region36
        $region35: #{embedding_forward.1} parent=31 // pred_region
          %s227 = sadd.s32 %s21, %s22
          %p228 = scmp.lt.s32.totalorder %s227, 1
          %s229 = scalar_select %p228, %s227, 1
          %s230 = smul.addr %s229, 8
          %s231 = scalar_lea.vmem %s0, %s230
          %s232 = sadd.s32 %s21, %s22
        $region36: #{embedding_forward.1} parent=31 // pred_fallthru
          _
      $region32: #{embedding_forward.1} parent=5 // pred_fallthru
        _
      %p233 = scmp.le.s32.totalorder 1, %s14
      %p234 = scmp.lt.s32.totalorder %s14, 3
      %p235 = pnand %p233, %p234
      %p236 = pneg %p235
      // Predicated region
      $region37: #{embedding_forward.1} parent=5 // pred_check
        _
      $region38: #{embedding_forward.1} parent=5 // pred_check_branch
        %238 = sbr.rel (%p235) target = $region40
      $region39: #{embedding_forward.1} parent=5 // pred_region
        %s239 = ssub.s32 %s14, 1
        %s240 = sadd.s32 %s24, %s25
        %p241 = scmp.lt.s32.totalorder %s240, 1
        %s242 = scalar_select %p241, %s240, 1
        %s243 = smul.addr %s242, 8
        %s244 = scalar_lea.vmem %s0, %s243
        %p245 = pneg %p61
        %p246 = pneg %p58
        %s247 = smul.u32 8, %s26
        %p248 = scmp.lt.s32.totalorder %s247, 7
        %s249 = scalar_select %p248, %s247, 7
        %s250 = smul.addr %s249, 8
        %s251 = scalar_lea.vmem %s1, %s250
        %p252 = pneg %p87
        %p253 = pneg %p84
        %p254 = scmp.lt.s32.totalorder %s25, 0
        %s255 = scalar_select %p254, %s25, 0
        %s256 = smul.addr %s255, 8
        %s257 = scalar_lea.vmem %s2, %s256
        %p258 = pneg %p113
        %p259 = pneg %p110
        %p260 = pneg %p134
        %p261 = pneg %p131
        %p262 = pneg %p155
        %p263 = pneg %p152
        %p264 = pneg %p183
        %p265 = pneg %p180
        %s266 = sand.u32 %s170, 1
        %s267 = scalar_lea.sflag [#allocation3], %s266
        %s268 = sand.u32 %s170, 1
        %s269 = smul.addr %s268, 8
        %s270 = scalar_lea.vmem [#allocation2], %s269
        %s271 = sadd.s32 %s24, %s25
        %p272 = scmp.lt.s32.totalorder %s271, 1
        %s273 = scalar_select %p272, %s271, 1
        %s274 = smul.addr %s273, 8
        %s275 = scalar_lea.vmem %s0, %s274
        %s276 = sadd.s32 %s24, %s25
        %s277 = smul.u32 8, %s26
        %p278 = scmp.lt.s32.totalorder %s277, 7
        %s279 = scalar_select %p278, %s277, 7
        %s280 = smul.addr %s279, 8
        %s281 = scalar_lea.vmem %s1, %s280
        %s282 = smul.u32 8, %s26
        %p283 = scmp.lt.s32.totalorder %s25, 0
        %s284 = scalar_select %p283, %s25, 0
        %s285 = smul.addr %s284, 8
        %s286 = scalar_lea.vmem %s2, %s285
        %s287 = sadd.s32 %s24, %s25
        %v288 = vld [vmem:[%s275] sm:$0xff]
        %v289 = vlaneseq
        %v290 = vand.u32 %v289, 127
        %s291 = smul.u32 %s26, 64
        %v292 = vstv %s291
        %v293 = vadd.s32 %v290, %v292
        %294 = vset.pattern.permute.xlu0 0
        %295 = vperm.xlu0 %294, %v288
        %v296 = vpop.permute.xlu0 %295
        %vm297 = vcmp.eq.s32.totalorder %v296, %v293
        %v298 = vsel %vm297, 1, 0
        %v299 = vcvt.s32.f32 %v298
        %v300 = vld [vmem:[%s281] sm:$0xff]
        %v301 = vld [vmem:[%s281 + $0x8] sm:$0xff]
        %v302 = vld [vmem:[%s281 + $0x10] sm:$0xff]
        %v303 = vld [vmem:[%s281 + $0x18] sm:$0xff]
        %v304 = vld [vmem:[%s281 + $0x20] sm:$0xff]
        %v305 = vld [vmem:[%s281 + $0x28] sm:$0xff]
        %v306 = vld [vmem:[%s281 + $0x30] sm:$0xff]
        %v307 = vld [vmem:[%s281 + $0x38] sm:$0xff]
        %vm308 = vcmask 523264
        %v310 = vsel %vm308, %v299, 0
        %312 = vmatprep.subr.mxu0 0.0
        %313 = vmatpush1.msra.mxu0 0.0
        %314 = vmatprep.subr.mxu0 0.0
        %315 = vmatpush1.msra.mxu0 0.0
        %316 = vmatprep.subr.mxu0 0.0
        %317 = vmatpush1.msra.mxu0 0.0
        %318 = vmatprep.subr.mxu0 0.0
        %319 = vmatpush1.msra.mxu0 0.0
        %320 = vmatprep.subr.mxu0 0.0
        %321 = vmatpush1.msra.mxu0 0.0
        %322 = vmatprep.subr.mxu0 0.0
        %323 = vmatpush1.msra.mxu0 0.0
        %324 = vmatprep.subr.mxu0 0.0
        %325 = vmatpush1.msra.mxu0 0.0
        %326 = vmatprep.subr.mxu0 0.0
        %327 = vmatpush1.msra.mxu0 0.0
        %328 = vmatprep.subr.mxu0 0.0
        %v329 = vand.u32 %v307, 4294901760
        %330 = vmatpush1.msra.mxu0 %v329
        %331 = vmatprep.subr.mxu0 0.0
        %v332 = vand.u32 %v306, 4294901760
        %333 = vmatpush1.msra.mxu0 %v332
        %334 = vmatprep.subr.mxu0 0.0
        %v335 = vand.u32 %v305, 4294901760
        %336 = vmatpush1.msra.mxu0 %v335
        %337 = vmatprep.subr.mxu0 0.0
        %v338 = vand.u32 %v304, 4294901760
        %339 = vmatpush1.msra.mxu0 %v338
        %340 = vmatprep.subr.mxu0 0.0
        %v341 = vand.u32 %v303, 4294901760
        %342 = vmatpush1.msra.mxu0 %v341
        %343 = vmatprep.subr.mxu0 0.0
        %v344 = vand.u32 %v302, 4294901760
        %345 = vmatpush1.msra.mxu0 %v344
        %346 = vmatprep.subr.mxu0 0.0
        %v347 = vand.u32 %v301, 4294901760
        %348 = vmatpush1.msra.mxu0 %v347
        %349 = vmatprep.subr.mxu0 0.0
        %v350 = vand.u32 %v300, 4294901760
        %351 = vmatpush1.msra.mxu0 %v350
        %352 = vmatprep.subr.mxu0 0.0
        %353 = vmatpush2.msra.mxu0 0.0
        %354 = vmatprep.subr.mxu0 0.0
        %355 = vmatpush2.msra.mxu0 0.0
        %356 = vmatprep.subr.mxu0 0.0
        %357 = vmatpush2.msra.mxu0 0.0
        %358 = vmatprep.subr.mxu0 0.0
        %359 = vmatpush2.msra.mxu0 0.0
        %360 = vmatprep.subr.mxu0 0.0
        %361 = vmatpush2.msra.mxu0 0.0
        %362 = vmatprep.subr.mxu0 0.0
        %363 = vmatpush2.msra.mxu0 0.0
        %364 = vmatprep.subr.mxu0 0.0
        %365 = vmatpush2.msra.mxu0 0.0
        %366 = vmatprep.subr.mxu0 0.0
        %367 = vmatpush2.msra.mxu0 0.0
        %368 = vmatprep.subr.mxu0 0.0
        %369 = vmatpush2.msra.mxu0 0.0
        %370 = vmatprep.subr.mxu0 0.0
        %371 = vmatpush2.msra.mxu0 0.0
        %372 = vmatprep.subr.mxu0 0.0
        %373 = vmatpush2.msra.mxu0 0.0
        %374 = vmatprep.subr.mxu0 0.0
        %375 = vmatpush2.msra.mxu0 0.0
        %376 = vmatprep.subr.mxu0 0.0
        %377 = vmatpush2.msra.mxu0 0.0
        %378 = vmatprep.subr.mxu0 0.0
        %379 = vmatpush2.msra.mxu0 0.0
        %380 = vmatprep.subr.mxu0 0.0
        %381 = vmatpush2.msra.mxu0 0.0
        %382 = vmatprep.subr.mxu0 0.0
        %383 = vmatpush2.msra.mxu0 0.0
        %384 = vmatprep.mubr.f32.mxu0 0.0
        %v385 = vand.u32 %v310, 4294901760
        %v386 = vsub.f32 %v310, %v385
        %v387 = vand.u32 %v386, 4294901760
        %v388 = vsub.f32 %v386, %v387
        %v389 = vand.u32 %v388, 4294901760
        %390 = vmatmul.mubr.f32.gmra.mxu0 %v389
        %v391 = vpop.f32.mrf.mxu0
        %v392 = vadd.f32 0.0, %v391
        %v393 = vpop.f32.mrf.mxu0
        %394 = vdwg.mxu0
        %395 = vmatprep.subr.mxu0 0.0
        %396 = vmatpush1.msra.mxu0 0.0
        %397 = vmatprep.subr.mxu0 0.0
        %398 = vmatpush1.msra.mxu0 0.0
        %399 = vmatprep.subr.mxu0 0.0
        %400 = vmatpush1.msra.mxu0 0.0
        %401 = vmatprep.subr.mxu0 0.0
        %402 = vmatpush1.msra.mxu0 0.0
        %403 = vmatprep.subr.mxu0 0.0
        %404 = vmatpush1.msra.mxu0 0.0
        %405 = vmatprep.subr.mxu0 0.0
        %406 = vmatpush1.msra.mxu0 0.0
        %407 = vmatprep.subr.mxu0 0.0
        %408 = vmatpush1.msra.mxu0 0.0
        %409 = vmatprep.subr.mxu0 0.0
        %410 = vmatpush1.msra.mxu0 0.0
        %411 = vmatprep.subr.mxu0 0.0
        %v412 = vand.u32 %v307, 4294901760
        %v413 = vsub.f32 %v307, %v412
        %v414 = vand.u32 %v413, 4294901760
        %v415 = vsub.f32 %v413, %v414
        %v416 = vand.u32 %v415, 4294901760
        %417 = vmatpush1.msra.mxu0 %v416
        %418 = vmatprep.subr.mxu0 0.0
        %v419 = vand.u32 %v306, 4294901760
        %v420 = vsub.f32 %v306, %v419
        %v421 = vand.u32 %v420, 4294901760
        %v422 = vsub.f32 %v420, %v421
        %v423 = vand.u32 %v422, 4294901760
        %424 = vmatpush1.msra.mxu0 %v423
        %425 = vmatprep.subr.mxu0 0.0
        %v426 = vand.u32 %v305, 4294901760
        %v427 = vsub.f32 %v305, %v426
        %v428 = vand.u32 %v427, 4294901760
        %v429 = vsub.f32 %v427, %v428
        %v430 = vand.u32 %v429, 4294901760
        %431 = vmatpush1.msra.mxu0 %v430
        %432 = vmatprep.subr.mxu0 0.0
        %v433 = vand.u32 %v304, 4294901760
        %v434 = vsub.f32 %v304, %v433
        %v435 = vand.u32 %v434, 4294901760
        %v436 = vsub.f32 %v434, %v435
        %v437 = vand.u32 %v436, 4294901760
        %438 = vmatpush1.msra.mxu0 %v437
        %439 = vmatprep.subr.mxu0 0.0
        %v440 = vand.u32 %v303, 4294901760
        %v441 = vsub.f32 %v303, %v440
        %v442 = vand.u32 %v441, 4294901760
        %v443 = vsub.f32 %v441, %v442
        %v444 = vand.u32 %v443, 4294901760
        %445 = vmatpush1.msra.mxu0 %v444
        %446 = vmatprep.subr.mxu0 0.0
        %v447 = vand.u32 %v302, 4294901760
        %v448 = vsub.f32 %v302, %v447
        %v449 = vand.u32 %v448, 4294901760
        %v450 = vsub.f32 %v448, %v449
        %v451 = vand.u32 %v450, 4294901760
        %452 = vmatpush1.msra.mxu0 %v451
        %453 = vmatprep.subr.mxu0 0.0
        %v454 = vand.u32 %v301, 4294901760
        %v455 = vsub.f32 %v301, %v454
        %v456 = vand.u32 %v455, 4294901760
        %v457 = vsub.f32 %v455, %v456
        %v458 = vand.u32 %v457, 4294901760
        %459 = vmatpush1.msra.mxu0 %v458
        %460 = vmatprep.subr.mxu0 0.0
        %v461 = vand.u32 %v300, 4294901760
        %v462 = vsub.f32 %v300, %v461
        %v463 = vand.u32 %v462, 4294901760
        %v464 = vsub.f32 %v462, %v463
        %v465 = vand.u32 %v464, 4294901760
        %466 = vmatpush1.msra.mxu0 %v465
        %467 = vmatprep.subr.mxu0 0.0
        %468 = vmatpush2.msra.mxu0 0.0
        %469 = vmatprep.subr.mxu0 0.0
        %470 = vmatpush2.msra.mxu0 0.0
        %471 = vmatprep.subr.mxu0 0.0
        %472 = vmatpush2.msra.mxu0 0.0
        %473 = vmatprep.subr.mxu0 0.0
        %474 = vmatpush2.msra.mxu0 0.0
        %475 = vmatprep.subr.mxu0 0.0
        %476 = vmatpush2.msra.mxu0 0.0
        %477 = vmatprep.subr.mxu0 0.0
        %478 = vmatpush2.msra.mxu0 0.0
        %479 = vmatprep.subr.mxu0 0.0
        %480 = vmatpush2.msra.mxu0 0.0
        %481 = vmatprep.subr.mxu0 0.0
        %482 = vmatpush2.msra.mxu0 0.0
        %483 = vmatprep.subr.mxu0 0.0
        %484 = vmatpush2.msra.mxu0 0.0
        %485 = vmatprep.subr.mxu0 0.0
        %486 = vmatpush2.msra.mxu0 0.0
        %487 = vmatprep.subr.mxu0 0.0
        %488 = vmatpush2.msra.mxu0 0.0
        %489 = vmatprep.subr.mxu0 0.0
        %490 = vmatpush2.msra.mxu0 0.0
        %491 = vmatprep.subr.mxu0 0.0
        %492 = vmatpush2.msra.mxu0 0.0
        %493 = vmatprep.subr.mxu0 0.0
        %494 = vmatpush2.msra.mxu0 0.0
        %495 = vmatprep.subr.mxu0 0.0
        %496 = vmatpush2.msra.mxu0 0.0
        %497 = vmatprep.subr.mxu0 0.0
        %498 = vmatpush2.msra.mxu0 0.0
        %499 = vmatprep.mubr.f32.mxu0 0.0
        %v500 = vand.u32 %v310, 4294901760
        %501 = vmatmul.mubr.f32.gmra.mxu0 %v500
        %v502 = vpop.f32.mrf.mxu0
        %v503 = vadd.f32 %v392, %v502
        %v504 = vpop.f32.mrf.mxu0
        %505 = vdwg.mxu0
        %506 = vmatprep.subr.mxu0 0.0
        %507 = vmatpush1.msra.mxu0 0.0
        %508 = vmatprep.subr.mxu0 0.0
        %509 = vmatpush1.msra.mxu0 0.0
        %510 = vmatprep.subr.mxu0 0.0
        %511 = vmatpush1.msra.mxu0 0.0
        %512 = vmatprep.subr.mxu0 0.0
        %513 = vmatpush1.msra.mxu0 0.0
        %514 = vmatprep.subr.mxu0 0.0
        %515 = vmatpush1.msra.mxu0 0.0
        %516 = vmatprep.subr.mxu0 0.0
        %517 = vmatpush1.msra.mxu0 0.0
        %518 = vmatprep.subr.mxu0 0.0
        %519 = vmatpush1.msra.mxu0 0.0
        %520 = vmatprep.subr.mxu0 0.0
        %521 = vmatpush1.msra.mxu0 0.0
        %522 = vmatprep.subr.mxu0 0.0
        %v523 = vand.u32 %v307, 4294901760
        %v524 = vsub.f32 %v307, %v523
        %525 = vmatpush1.msra.mxu0 %v524
        %526 = vmatprep.subr.mxu0 0.0
        %v527 = vand.u32 %v306, 4294901760
        %v528 = vsub.f32 %v306, %v527
        %529 = vmatpush1.msra.mxu0 %v528
        %530 = vmatprep.subr.mxu0 0.0
        %v531 = vand.u32 %v305, 4294901760
        %v532 = vsub.f32 %v305, %v531
        %533 = vmatpush1.msra.mxu0 %v532
        %534 = vmatprep.subr.mxu0 0.0
        %v535 = vand.u32 %v304, 4294901760
        %v536 = vsub.f32 %v304, %v535
        %537 = vmatpush1.msra.mxu0 %v536
        %538 = vmatprep.subr.mxu0 0.0
        %v539 = vand.u32 %v303, 4294901760
        %v540 = vsub.f32 %v303, %v539
        %541 = vmatpush1.msra.mxu0 %v540
        %542 = vmatprep.subr.mxu0 0.0
        %v543 = vand.u32 %v302, 4294901760
        %v544 = vsub.f32 %v302, %v543
        %545 = vmatpush1.msra.mxu0 %v544
        %546 = vmatprep.subr.mxu0 0.0
        %v547 = vand.u32 %v301, 4294901760
        %v548 = vsub.f32 %v301, %v547
        %549 = vmatpush1.msra.mxu0 %v548
        %550 = vmatprep.subr.mxu0 0.0
        %v551 = vand.u32 %v300, 4294901760
        %v552 = vsub.f32 %v300, %v551
        %553 = vmatpush1.msra.mxu0 %v552
        %554 = vmatprep.subr.mxu0 0.0
        %555 = vmatpush2.msra.mxu0 0.0
        %556 = vmatprep.subr.mxu0 0.0
        %557 = vmatpush2.msra.mxu0 0.0
        %558 = vmatprep.subr.mxu0 0.0
        %559 = vmatpush2.msra.mxu0 0.0
        %560 = vmatprep.subr.mxu0 0.0
        %561 = vmatpush2.msra.mxu0 0.0
        %562 = vmatprep.subr.mxu0 0.0
        %563 = vmatpush2.msra.mxu0 0.0
        %564 = vmatprep.subr.mxu0 0.0
        %565 = vmatpush2.msra.mxu0 0.0
        %566 = vmatprep.subr.mxu0 0.0
        %567 = vmatpush2.msra.mxu0 0.0
        %568 = vmatprep.subr.mxu0 0.0
        %569 = vmatpush2.msra.mxu0 0.0
        %570 = vmatprep.subr.mxu0 0.0
        %571 = vmatpush2.msra.mxu0 0.0
        %572 = vmatprep.subr.mxu0 0.0
        %573 = vmatpush2.msra.mxu0 0.0
        %574 = vmatprep.subr.mxu0 0.0
        %575 = vmatpush2.msra.mxu0 0.0
        %576 = vmatprep.subr.mxu0 0.0
        %577 = vmatpush2.msra.mxu0 0.0
        %578 = vmatprep.subr.mxu0 0.0
        %579 = vmatpush2.msra.mxu0 0.0
        %580 = vmatprep.subr.mxu0 0.0
        %581 = vmatpush2.msra.mxu0 0.0
        %582 = vmatprep.subr.mxu0 0.0
        %583 = vmatpush2.msra.mxu0 0.0
        %584 = vmatprep.subr.mxu0 0.0
        %585 = vmatpush2.msra.mxu0 0.0
        %586 = vmatprep.mubr.f32.mxu0 0.0
        %v587 = vand.u32 %v310, 4294901760
        %v588 = vsub.f32 %v310, %v587
        %589 = vmatmul.mubr.f32.gmra.mxu0 %v588
        %v590 = vpop.f32.mrf.mxu0
        %v591 = vadd.f32 %v503, %v590
        %v592 = vpop.f32.mrf.mxu0
        %593 = vdwg.mxu0
        %594 = vmatprep.subr.mxu0 0.0
        %595 = vmatpush1.msra.mxu0 0.0
        %596 = vmatprep.subr.mxu0 0.0
        %597 = vmatpush1.msra.mxu0 0.0
        %598 = vmatprep.subr.mxu0 0.0
        %599 = vmatpush1.msra.mxu0 0.0
        %600 = vmatprep.subr.mxu0 0.0
        %601 = vmatpush1.msra.mxu0 0.0
        %602 = vmatprep.subr.mxu0 0.0
        %603 = vmatpush1.msra.mxu0 0.0
        %604 = vmatprep.subr.mxu0 0.0
        %605 = vmatpush1.msra.mxu0 0.0
        %606 = vmatprep.subr.mxu0 0.0
        %607 = vmatpush1.msra.mxu0 0.0
        %608 = vmatprep.subr.mxu0 0.0
        %609 = vmatpush1.msra.mxu0 0.0
        %610 = vmatprep.subr.mxu0 0.0
        %v611 = vand.u32 %v307, 4294901760
        %612 = vmatpush1.msra.mxu0 %v611
        %613 = vmatprep.subr.mxu0 0.0
        %v614 = vand.u32 %v306, 4294901760
        %615 = vmatpush1.msra.mxu0 %v614
        %616 = vmatprep.subr.mxu0 0.0
        %v617 = vand.u32 %v305, 4294901760
        %618 = vmatpush1.msra.mxu0 %v617
        %619 = vmatprep.subr.mxu0 0.0
        %v620 = vand.u32 %v304, 4294901760
        %621 = vmatpush1.msra.mxu0 %v620
        %622 = vmatprep.subr.mxu0 0.0
        %v623 = vand.u32 %v303, 4294901760
        %624 = vmatpush1.msra.mxu0 %v623
        %625 = vmatprep.subr.mxu0 0.0
        %v626 = vand.u32 %v302, 4294901760
        %627 = vmatpush1.msra.mxu0 %v626
        %628 = vmatprep.subr.mxu0 0.0
        %v629 = vand.u32 %v301, 4294901760
        %630 = vmatpush1.msra.mxu0 %v629
        %631 = vmatprep.subr.mxu0 0.0
        %v632 = vand.u32 %v300, 4294901760
        %633 = vmatpush1.msra.mxu0 %v632
        %634 = vmatprep.subr.mxu0 0.0
        %635 = vmatpush2.msra.mxu0 0.0
        %636 = vmatprep.subr.mxu0 0.0
        %637 = vmatpush2.msra.mxu0 0.0
        %638 = vmatprep.subr.mxu0 0.0
        %639 = vmatpush2.msra.mxu0 0.0
        %640 = vmatprep.subr.mxu0 0.0
        %641 = vmatpush2.msra.mxu0 0.0
        %642 = vmatprep.subr.mxu0 0.0
        %643 = vmatpush2.msra.mxu0 0.0
        %644 = vmatprep.subr.mxu0 0.0
        %645 = vmatpush2.msra.mxu0 0.0
        %646 = vmatprep.subr.mxu0 0.0
        %647 = vmatpush2.msra.mxu0 0.0
        %648 = vmatprep.subr.mxu0 0.0
        %649 = vmatpush2.msra.mxu0 0.0
        %650 = vmatprep.subr.mxu0 0.0
        %651 = vmatpush2.msra.mxu0 0.0
        %652 = vmatprep.subr.mxu0 0.0
        %653 = vmatpush2.msra.mxu0 0.0
        %654 = vmatprep.subr.mxu0 0.0
        %655 = vmatpush2.msra.mxu0 0.0
        %656 = vmatprep.subr.mxu0 0.0
        %657 = vmatpush2.msra.mxu0 0.0
        %658 = vmatprep.subr.mxu0 0.0
        %659 = vmatpush2.msra.mxu0 0.0
        %660 = vmatprep.subr.mxu0 0.0
        %661 = vmatpush2.msra.mxu0 0.0
        %662 = vmatprep.subr.mxu0 0.0
        %663 = vmatpush2.msra.mxu0 0.0
        %664 = vmatprep.subr.mxu0 0.0
        %665 = vmatpush2.msra.mxu0 0.0
        %666 = vmatprep.mubr.f32.mxu0 0.0
        %v667 = vand.u32 %v310, 4294901760
        %v668 = vsub.f32 %v310, %v667
        %v669 = vand.u32 %v668, 4294901760
        %670 = vmatmul.mubr.f32.gmra.mxu0 %v669
        %v671 = vpop.f32.mrf.mxu0
        %v672 = vadd.f32 %v591, %v671
        %v673 = vpop.f32.mrf.mxu0
        %674 = vdwg.mxu0
        %675 = vmatprep.subr.mxu0 0.0
        %676 = vmatpush1.msra.mxu0 0.0
        %677 = vmatprep.subr.mxu0 0.0
        %678 = vmatpush1.msra.mxu0 0.0
        %679 = vmatprep.subr.mxu0 0.0
        %680 = vmatpush1.msra.mxu0 0.0
        %681 = vmatprep.subr.mxu0 0.0
        %682 = vmatpush1.msra.mxu0 0.0
        %683 = vmatprep.subr.mxu0 0.0
        %684 = vmatpush1.msra.mxu0 0.0
        %685 = vmatprep.subr.mxu0 0.0
        %686 = vmatpush1.msra.mxu0 0.0
        %687 = vmatprep.subr.mxu0 0.0
        %688 = vmatpush1.msra.mxu0 0.0
        %689 = vmatprep.subr.mxu0 0.0
        %690 = vmatpush1.msra.mxu0 0.0
        %691 = vmatprep.subr.mxu0 0.0
        %v692 = vand.u32 %v307, 4294901760
        %v693 = vsub.f32 %v307, %v692
        %v694 = vand.u32 %v693, 4294901760
        %695 = vmatpush1.msra.mxu0 %v694
        %696 = vmatprep.subr.mxu0 0.0
        %v697 = vand.u32 %v306, 4294901760
        %v698 = vsub.f32 %v306, %v697
        %v699 = vand.u32 %v698, 4294901760
        %700 = vmatpush1.msra.mxu0 %v699
        %701 = vmatprep.subr.mxu0 0.0
        %v702 = vand.u32 %v305, 4294901760
        %v703 = vsub.f32 %v305, %v702
        %v704 = vand.u32 %v703, 4294901760
        %705 = vmatpush1.msra.mxu0 %v704
        %706 = vmatprep.subr.mxu0 0.0
        %v707 = vand.u32 %v304, 4294901760
        %v708 = vsub.f32 %v304, %v707
        %v709 = vand.u32 %v708, 4294901760
        %710 = vmatpush1.msra.mxu0 %v709
        %711 = vmatprep.subr.mxu0 0.0
        %v712 = vand.u32 %v303, 4294901760
        %v713 = vsub.f32 %v303, %v712
        %v714 = vand.u32 %v713, 4294901760
        %715 = vmatpush1.msra.mxu0 %v714
        %716 = vmatprep.subr.mxu0 0.0
        %v717 = vand.u32 %v302, 4294901760
        %v718 = vsub.f32 %v302, %v717
        %v719 = vand.u32 %v718, 4294901760
        %720 = vmatpush1.msra.mxu0 %v719
        %721 = vmatprep.subr.mxu0 0.0
        %v722 = vand.u32 %v301, 4294901760
        %v723 = vsub.f32 %v301, %v722
        %v724 = vand.u32 %v723, 4294901760
        %725 = vmatpush1.msra.mxu0 %v724
        %726 = vmatprep.subr.mxu0 0.0
        %v727 = vand.u32 %v300, 4294901760
        %v728 = vsub.f32 %v300, %v727
        %v729 = vand.u32 %v728, 4294901760
        %730 = vmatpush1.msra.mxu0 %v729
        %731 = vmatprep.subr.mxu0 0.0
        %732 = vmatpush2.msra.mxu0 0.0
        %733 = vmatprep.subr.mxu0 0.0
        %734 = vmatpush2.msra.mxu0 0.0
        %735 = vmatprep.subr.mxu0 0.0
        %736 = vmatpush2.msra.mxu0 0.0
        %737 = vmatprep.subr.mxu0 0.0
        %738 = vmatpush2.msra.mxu0 0.0
        %739 = vmatprep.subr.mxu0 0.0
        %740 = vmatpush2.msra.mxu0 0.0
        %741 = vmatprep.subr.mxu0 0.0
        %742 = vmatpush2.msra.mxu0 0.0
        %743 = vmatprep.subr.mxu0 0.0
        %744 = vmatpush2.msra.mxu0 0.0
        %745 = vmatprep.subr.mxu0 0.0
        %746 = vmatpush2.msra.mxu0 0.0
        %747 = vmatprep.subr.mxu0 0.0
        %748 = vmatpush2.msra.mxu0 0.0
        %749 = vmatprep.subr.mxu0 0.0
        %750 = vmatpush2.msra.mxu0 0.0
        %751 = vmatprep.subr.mxu0 0.0
        %752 = vmatpush2.msra.mxu0 0.0
        %753 = vmatprep.subr.mxu0 0.0
        %754 = vmatpush2.msra.mxu0 0.0
        %755 = vmatprep.subr.mxu0 0.0
        %756 = vmatpush2.msra.mxu0 0.0
        %757 = vmatprep.subr.mxu0 0.0
        %758 = vmatpush2.msra.mxu0 0.0
        %759 = vmatprep.subr.mxu0 0.0
        %760 = vmatpush2.msra.mxu0 0.0
        %761 = vmatprep.subr.mxu0 0.0
        %762 = vmatpush2.msra.mxu0 0.0
        %763 = vmatprep.mubr.f32.mxu0 0.0
        %v764 = vand.u32 %v310, 4294901760
        %765 = vmatmul.mubr.f32.gmra.mxu0 %v764
        %v766 = vpop.f32.mrf.mxu0
        %v767 = vadd.f32 %v672, %v766
        %v768 = vpop.f32.mrf.mxu0
        %769 = vdwg.mxu0
        %770 = vmatprep.subr.mxu0 0.0
        %771 = vmatpush1.msra.mxu0 0.0
        %772 = vmatprep.subr.mxu0 0.0
        %773 = vmatpush1.msra.mxu0 0.0
        %774 = vmatprep.subr.mxu0 0.0
        %775 = vmatpush1.msra.mxu0 0.0
        %776 = vmatprep.subr.mxu0 0.0
        %777 = vmatpush1.msra.mxu0 0.0
        %778 = vmatprep.subr.mxu0 0.0
        %779 = vmatpush1.msra.mxu0 0.0
        %780 = vmatprep.subr.mxu0 0.0
        %781 = vmatpush1.msra.mxu0 0.0
        %782 = vmatprep.subr.mxu0 0.0
        %783 = vmatpush1.msra.mxu0 0.0
        %784 = vmatprep.subr.mxu0 0.0
        %785 = vmatpush1.msra.mxu0 0.0
        %786 = vmatprep.subr.mxu0 0.0
        %v787 = vand.u32 %v307, 4294901760
        %788 = vmatpush1.msra.mxu0 %v787
        %789 = vmatprep.subr.mxu0 0.0
        %v790 = vand.u32 %v306, 4294901760
        %791 = vmatpush1.msra.mxu0 %v790
        %792 = vmatprep.subr.mxu0 0.0
        %v793 = vand.u32 %v305, 4294901760
        %794 = vmatpush1.msra.mxu0 %v793
        %795 = vmatprep.subr.mxu0 0.0
        %v796 = vand.u32 %v304, 4294901760
        %797 = vmatpush1.msra.mxu0 %v796
        %798 = vmatprep.subr.mxu0 0.0
        %v799 = vand.u32 %v303, 4294901760
        %800 = vmatpush1.msra.mxu0 %v799
        %801 = vmatprep.subr.mxu0 0.0
        %v802 = vand.u32 %v302, 4294901760
        %803 = vmatpush1.msra.mxu0 %v802
        %804 = vmatprep.subr.mxu0 0.0
        %v805 = vand.u32 %v301, 4294901760
        %806 = vmatpush1.msra.mxu0 %v805
        %807 = vmatprep.subr.mxu0 0.0
        %v808 = vand.u32 %v300, 4294901760
        %809 = vmatpush1.msra.mxu0 %v808
        %810 = vmatprep.subr.mxu0 0.0
        %811 = vmatpush2.msra.mxu0 0.0
        %812 = vmatprep.subr.mxu0 0.0
        %813 = vmatpush2.msra.mxu0 0.0
        %814 = vmatprep.subr.mxu0 0.0
        %815 = vmatpush2.msra.mxu0 0.0
        %816 = vmatprep.subr.mxu0 0.0
        %817 = vmatpush2.msra.mxu0 0.0
        %818 = vmatprep.subr.mxu0 0.0
        %819 = vmatpush2.msra.mxu0 0.0
        %820 = vmatprep.subr.mxu0 0.0
        %821 = vmatpush2.msra.mxu0 0.0
        %822 = vmatprep.subr.mxu0 0.0
        %823 = vmatpush2.msra.mxu0 0.0
        %824 = vmatprep.subr.mxu0 0.0
        %825 = vmatpush2.msra.mxu0 0.0
        %826 = vmatprep.subr.mxu0 0.0
        %827 = vmatpush2.msra.mxu0 0.0
        %828 = vmatprep.subr.mxu0 0.0
        %829 = vmatpush2.msra.mxu0 0.0
        %830 = vmatprep.subr.mxu0 0.0
        %831 = vmatpush2.msra.mxu0 0.0
        %832 = vmatprep.subr.mxu0 0.0
        %833 = vmatpush2.msra.mxu0 0.0
        %834 = vmatprep.subr.mxu0 0.0
        %835 = vmatpush2.msra.mxu0 0.0
        %836 = vmatprep.subr.mxu0 0.0
        %837 = vmatpush2.msra.mxu0 0.0
        %838 = vmatprep.subr.mxu0 0.0
        %839 = vmatpush2.msra.mxu0 0.0
        %840 = vmatprep.subr.mxu0 0.0
        %841 = vmatpush2.msra.mxu0 0.0
        %842 = vmatprep.mubr.f32.mxu0 0.0
        %v843 = vand.u32 %v310, 4294901760
        %844 = vmatmul.mubr.f32.gmra.mxu0 %v843
        %v845 = vpop.f32.mrf.mxu0
        %v846 = vadd.f32 %v767, %v845
        %v847 = vpop.f32.mrf.mxu0
        %848 = vdwg.mxu0
        %p849 = scmp.eq.s32.totalorder %s26, 0
        // Predicated region
        $region41: #{embedding_forward.1} parent=39 // pred_check
          %p850 = pneg %p849
        $region42: #{embedding_forward.1} parent=39 // pred_check_branch
          %852 = sbr.rel (%p850) target = $region44
        $region43: #{embedding_forward.1} parent=39 // pred_region
          %vm853 = vcmask 261120
          %854 = vst.msk [vmem:[%s270] sm:$0xff] %vm853, %v846
        $region44: #{embedding_forward.1} parent=39 // pred_fallthru
          _
        %p855 = scmp.gt.s32.totalorder %s26, 0
        // Predicated region
        $region45: #{embedding_forward.1} parent=39 // pred_check
          %p856 = pneg %p855
        $region46: #{embedding_forward.1} parent=39 // pred_check_branch
          %858 = sbr.rel (%p856) target = $region48
        $region47: #{embedding_forward.1} parent=39 // pred_region
          %v859 = vld [vmem:[%s270] sm:$0xff]
          %v860 = vadd.f32 %v859, %v846
          %vm861 = vcmask 261120
          %862 = vst.msk [vmem:[%s270] sm:$0xff] %vm861, %v860
        $region48: #{embedding_forward.1} parent=39 // pred_fallthru
          _
        // Predicated region
        $region49: #{embedding_forward.1} parent=39 // pred_check
          %p863 = pneg %p849
        $region50: #{embedding_forward.1} parent=39 // pred_check_branch
          %865 = sbr.rel (%p863) target = $region52
        $region51: #{embedding_forward.1} parent=39 // pred_region
          %v866 = vld [vmem:[%s270] sm:$0xff]
          %v867 = vld [vmem:[%s286] sm:$0xff]
          %v868 = vadd.f32 %v866, %v867
          %vm869 = vcmask 261120
          %v870 = vsel %vm869, %v868, 0.0
          %871 = vadd.xlane.f32.xlu0 %v870
          %v872 = vpop.xlane.xlu0 %871
          %v873 = vrcp.pop 32.0
          %v874 = vmul.f32 %v872, %v873
          %v875 = vsub.f32 %v868, %v874
          %v876 = vmul.f32 %v875, %v875
          %v877 = vsel %vm869, %v876, 0.0
          %878 = vadd.xlane.f32.xlu0 %v877
          %v879 = vpop.xlane.xlu0 %878
          %v880 = vmul.f32 %v879, %v873
          %v881 = vadd.f32 %v880, 1e-05
          %v882 = vrsqrt.pop %v881
          %v883 = vmul.f32 %v875, %v882
          %v884 = vld [vmem:[%s3] sm:$0x1]
          %v886 = vlaneseq
          %v887 = vshrl.u32 %v886, 7
          %v888 = vsub.s32 0, %v887
          %v889 = vrot.slane %v884, %v888
          %v891 = vmul.f32 %v883, %v889
          %v892 = vld [vmem:[%s4] sm:$0x1]
          %v894 = vlaneseq
          %v895 = vshrl.u32 %v894, 7
          %v896 = vsub.s32 0, %v895
          %v897 = vrot.slane %v892, %v896
          %v899 = vadd.f32 %v891, %v897
          %900 = vst.msk [vmem:[%s270] sm:$0xff] %vm869, %v899
        $region52: #{embedding_forward.1} parent=39 // pred_fallthru
          _
        %s901 = sand.u32 %s170, 1
        %s902 = scalar_lea.sflag [#allocation3], %s901
        %s903 = sand.u32 %s170, 1
        %s904 = smul.addr %s903, 8
        %s905 = scalar_lea.vmem [#allocation2], %s904
        // Predicated region
        $region53: #{embedding_forward.1} parent=39 // pred_check
          %p906 = pneg %p180
        $region54: #{embedding_forward.1} parent=39 // pred_check_branch
          %908 = sbr.rel (%p906) target = $region56
        $region55: #{embedding_forward.1} parent=39 // pred_region
          %s909 = sadd.s32 %s24, %s25
          %s911 = ssub.s32 128, 128
          %912 = vsyncadd %s902, %s911
          %s913 = smul.addr %s909, 128
          %s914 = scalar_lea.hbm %s5, %s913
          %s916 = sshll.u32 %s905, 4
          %s917 = int_to_ptr.vmem [resolvable:$true] %s916
          %919 = dma.vmem_to_hbm [thread:$0]  %s917, 128, %s914, %s902
        $region56: #{embedding_forward.1} parent=39 // pred_fallthru
          _
      $region40: #{embedding_forward.1} parent=5 // pred_fallthru
        _
      %p920 = scmp.le.s32.totalorder 2, %s14
      // Predicated region
      $region57: #{embedding_forward.1} parent=5 // pred_check
        %p921 = pneg %p920
      $region58: #{embedding_forward.1} parent=5 // pred_check_branch
        %923 = sbr.rel (%p921) target = $region60
      $region59: #{embedding_forward.1} parent=5 // pred_region
        %s924 = ssub.s32 %s14, 2
        // Predicated region
        $region61: #{embedding_forward.1} parent=59 // pred_check
          %p925 = pneg %p186
        $region62: #{embedding_forward.1} parent=59 // pred_check_branch
          %927 = sbr.rel (%p925) target = $region64
        $region63: #{embedding_forward.1} parent=59 // pred_region
          %s928 = sand.u32 %s171, 1
          %s929 = scalar_lea.sflag [#allocation3], %s928
          %s930 = sand.u32 %s171, 1
          %s931 = smul.addr %s930, 8
          %s932 = scalar_lea.vmem [#allocation2], %s931
          %933 = dma.done %s929, 128
        $region64: #{embedding_forward.1} parent=59 // pred_fallthru
          _
      $region60: #{embedding_forward.1} parent=5 // pred_fallthru
        _
    $region6: #{embedding_forward.1} parent=1 // loop_footer
      %s18 = sadd.s32 1, %s14
    $region7: #{embedding_forward.1} parent=1 // loop_footer_branch
      %13 = sbr.rel target = $region3
    $region8: #{embedding_forward.1} parent=1 // loop_exit
      _
    %934 = vsyncpa [#allocation3], 1
    %s935 = scalar_lea.sflag [#allocation3], 1
    %936 = vsyncpa %s935, 1

</llo_original>
